<compile_context>
chip_gen: v7x
topology: tpu7x:2x2x1
jax: 0.10.0
libtpu: 0.0.40
codegen_flags: <defaults>
</compile_context>

<pallas_src>
import functools

import jax
import jax.numpy as jnp
from jax.experimental import pallas as pl
from jax.experimental.pallas import tpu as pltpu


def _round_up(x: int, m: int) -> int:
    return ((x + m - 1) // m) * m


def _pick_tile(dim: int, target: int, align: int) -> int:
    """Largest multiple of `align` that divides `dim` and is <= target."""
    assert dim % align == 0
    best = align
    t = align
    limit = min(target, dim)
    while t <= limit:
        if dim % t == 0:
            best = t
        t += align
    return best


def _linear_kernel_resident(x_ref, w_ref, b_ref, o_ref, *, tk):
    # x_ref: (tm, tk)   w_ref: (d_pad, c_pad) fully resident in VMEM
    # b_ref: (1, c_pad) f32   o_ref: (tm, c_pad) f32, k-invariant -> accumulator
    k = pl.program_id(1)

    @pl.when(k == 0)
    def _():
        o_ref[...] = jnp.broadcast_to(b_ref[...], o_ref.shape)

    w_blk = w_ref[pl.ds(pl.multiple_of(k * tk, 128), tk), :]
    o_ref[...] += jnp.dot(x_ref[...], w_blk, preferred_element_type=jnp.float32)


def _linear_kernel_streamed(x_ref, w_ref, b_ref, o_ref):
    # x_ref: (tm, tk)   w_ref: (tk, c_pad)   b_ref: (1, c_pad) f32
    # o_ref: (tm, c_pad) f32, k-invariant -> accumulator
    k = pl.program_id(1)

    @pl.when(k == 0)
    def _():
        o_ref[...] = jnp.broadcast_to(b_ref[...], o_ref.shape)

    o_ref[...] += jnp.dot(x_ref[...], w_ref[...],
                          preferred_element_type=jnp.float32)


def linear_classifier_forward(x_nchw, weight, bias, *, tm=None, tk=None,
                              use_bf16=True,
                              resident_w_bytes_limit=8 << 20):
    """Forward pass of LinearClassifier.

    Args:
      x_nchw: (B, 3, H, W) float32 image batch (NCHW, same as PyTorch).
      weight: (num_classes, 3*H*W) float32, nn.Linear.weight layout.
      bias:   (num_classes,) float32.
      tm, tk: optional tile-size targets (auto-picked otherwise).
      use_bf16: stream x / W as bf16 (f32 accumulation kept on the MXU).
      resident_w_bytes_limit: keep W fully resident in VMEM if it fits.

    Returns:
      (B, num_classes) float32 logits.
    """
    b = x_nchw.shape[0]
    c, d = weight.shape

    # Flatten exactly like x.view(b, -1) on an NCHW tensor (glue, not hot path).
    x_flat = x_nchw.reshape(b, d)
    bias_f32 = bias.astype(jnp.float32)

    stream_dtype = jnp.bfloat16 if use_bf16 else jnp.float32
    x_flat = x_flat.astype(stream_dtype)
    w = weight.astype(stream_dtype)
    itemsize = jnp.dtype(stream_dtype).itemsize
    m_align = 16 if use_bf16 else 8          # packed bf16 sublanes

    # Padded sizes: lane-dense class dim, sublane-aligned batch, 128-aligned D.
    c_pad = _round_up(c, 256) if c > 128 else _round_up(c, 128)
    b_pad = _round_up(b, m_align)
    d_pad = _round_up(d, 128)

    # One-time parameter prep (outside the hot loop): transpose W to (D, C) so
    # the kernel runs the canonical (tm,tk)@(tk,c_pad) MXU contraction, pad,
    # and shape bias as a (1, c_pad) row.
    w_t = jnp.pad(w.T, ((0, d_pad - d), (0, c_pad - c)))
    bias_p = jnp.pad(bias_f32, (0, c_pad - c)).reshape(1, c_pad)

    # Pad x only if actually needed (D is a multiple of 128 for 3*H*W images
    # with even H*W, so usually only a small batch remainder, if anything).
    if (b_pad - b) or (d_pad - d):
        x_flat = jnp.pad(x_flat, ((0, b_pad - b), (0, d_pad - d)))

    resident_w = (c_pad * d_pad * itemsize) <= resident_w_bytes_limit

    # Tile selection: exact divisors of the padded dims, aligned to the
    # (sublane, lane) grain.  Bigger batch tiles when W must be re-streamed.
    tm_target = tm if tm is not None else (256 if resident_w else 512)
    tk_target = tk if tk is not None else 4096
    tm = _pick_tile(b_pad, tm_target, m_align)
    tk = _pick_tile(d_pad, tk_target, 128)

    # v7x has 2 TensorCores sharded over the "parallel" batch axis: make sure
    # grid[0] >= 2 whenever the batch can be split (no effect on v5e/v6e).
    if b_pad // tm < 2 and b_pad // 2 >= m_align:
        tm_half = _pick_tile(b_pad, b_pad // 2, m_align)
        if b_pad // tm_half >= 2:
            tm = tm_half

    grid = (b_pad // tm, d_pad // tk)

    if resident_w:
        kernel = functools.partial(_linear_kernel_resident, tk=tk)
        w_spec = pl.BlockSpec((d_pad, c_pad), lambda i, k: (0, 0))
        w_vmem = d_pad * c_pad * itemsize       # constant block, fetched once
        w_hbm = c_pad * d_pad * itemsize
    else:
        kernel = _linear_kernel_streamed
        w_spec = pl.BlockSpec((tk, c_pad), lambda i, k: (k, 0))
        w_vmem = 2 * tk * c_pad * itemsize
        w_hbm = grid[0] * c_pad * d_pad * itemsize  # re-streamed per batch tile

    # VMEM budget -> explicit limit so v5e's 16 MiB scoped default never blocks
    # the chosen tiles, while staying well under v7x's 64 MiB physical VMEM.
    vmem_needed = (2 * tm * tk * itemsize          # x double buffer
                   + 2 * w_vmem                    # W (worst-case 2 buffers)
                   + 2 * tm * c_pad * 4            # output/accumulator
                   + 2 * 8 * c_pad * 4)            # bias row
    vmem_limit = int(min(max(vmem_needed + (4 << 20), 16 << 20), 48 << 20))

    bytes_accessed = (b_pad * d_pad * itemsize     # x read
                      + w_hbm                      # W read(s)
                      + b_pad * c_pad * 4          # logits write
                      + c_pad * 4)                 # bias read

    out = pl.pallas_call(
        kernel,
        out_shape=jax.ShapeDtypeStruct((b_pad, c_pad), jnp.float32),
        grid_spec=pltpu.PrefetchScalarGridSpec(
            num_scalar_prefetch=0,
            grid=grid,
            in_specs=[
                pl.BlockSpec((tm, tk), lambda i, k: (i, k)),    # x tile
                w_spec,                                          # weight
                pl.BlockSpec((1, c_pad), lambda i, k: (0, 0)),   # bias row
            ],
            out_specs=pl.BlockSpec((tm, c_pad), lambda i, k: (i, 0)),
        ),
        compiler_params=pltpu.CompilerParams(
            dimension_semantics=("parallel", "arbitrary"),
            vmem_limit_bytes=vmem_limit,
        ),
        cost_estimate=pl.CostEstimate(
            flops=2 * b_pad * d_pad * c_pad,
            transcendentals=0,
            bytes_accessed=int(bytes_accessed),
        ),
    )(x_flat, w_t, bias_p)

    return out[:b, :c]


def init_params(key, h, w, num_classes):
    """Deterministic init mimicking nn.Linear default (uniform +/- 1/sqrt(fan_in))."""
    input_size = 3 * h * w
    k_w, k_b = jax.random.split(key)
    bound = 1.0 / jnp.sqrt(jnp.float32(input_size))
    weight = jax.random.uniform(k_w, (num_classes, input_size), jnp.float32,
                                minval=-bound, maxval=bound)
    bias = jax.random.uniform(k_b, (num_classes,), jnp.float32,
                              minval=-bound, maxval=bound)
    return weight, bias


if __name__ == "__main__":
    # Small shapes consistent with the module: batch=2, 3 channels, 16x16
    # image, 6 classes (module default is 64x64; kernel handles both).
    B, H, W, NUM_CLASSES = 2, 16, 16, 6

    key = jax.random.PRNGKey(0)
    k_x, k_p = jax.random.split(key)
    x = jax.random.normal(k_x, (B, 3, H, W), dtype=jnp.float32)
    weight, bias = init_params(k_p, H, W, NUM_CLASSES)
    x_flat = x.reshape(B, -1)

    # Default path: bf16 streaming + f32 accumulation, resident-W kernel.
    logits = jax.block_until_ready(linear_classifier_forward(x, weight, bias))
    ref_bf16 = (x_flat.astype(jnp.bfloat16).astype(jnp.float32)
                @ weight.astype(jnp.bfloat16).astype(jnp.float32).T) + bias
    assert logits.shape == (B, NUM_CLASSES)
    assert jnp.allclose(logits, ref_bf16, atol=2e-2, rtol=2e-2)

    # Full-f32 path through the streamed-W fallback branch.
    logits_f32 = jax.block_until_ready(
        linear_classifier_forward(x, weight, bias, use_bf16=False,
                                  resident_w_bytes_limit=0))
    ref_f32 = jnp.dot(x_flat, weight.T,
                      precision=jax.lax.Precision.HIGHEST) + bias
    assert logits_f32.shape == (B, NUM_CLASSES)
    assert jnp.allclose(logits_f32, ref_f32, atol=5e-3, rtol=5e-3)

    print("KERNEL_OK")
</pallas_src>

<mosaic_0001>
module attributes {stable_mosaic.version = 11 : i64} {
  func.func @_linear_kernel_resident(%arg0: i32, %arg1: i32, %arg2: memref<16x768xbf16, #tpu.memory_space<vmem>>, %arg3: memref<768x128xbf16, #tpu.memory_space<vmem>>, %arg4: memref<1x128xf32, #tpu.memory_space<vmem>>, %arg5: memref<16x128xf32, #tpu.memory_space<vmem>>) attributes {dimension_semantics = [#tpu.dimension_semantics<parallel>, #tpu.dimension_semantics<arbitrary>], iteration_bounds = array<i64: 1, 1>, scalar_prefetch = 0 : i64, scratch_operands = 0 : i64, tpu.core_type = #tpu.core_type<tc>, window_params = [{transform_indices = @transform_0, window_bounds = array<i64: 16, 768>}, {pipeline_mode = #tpu.pipeline_mode<synchronous>, transform_indices = @transform_1, window_bounds = array<i64: 768, 128>}, {pipeline_mode = #tpu.pipeline_mode<synchronous>, transform_indices = @transform_2, window_bounds = array<i64: 1, 128>}, {transform_indices = @transform_3, window_bounds = array<i64: 16, 128>}]} {
    %c0_i32 = arith.constant 0 : i32
    %0 = arith.cmpi eq, %arg1, %c0_i32 : i32
    %1 = arith.extui %0 : i1 to i32
    %c0_i32_0 = arith.constant 0 : i32
    %2 = arith.cmpi ne, %1, %c0_i32_0 : i32
    scf.if %2 {
      %c0_7 = arith.constant 0 : index
      %c0_8 = arith.constant 0 : index
      %12 = vector.load %arg4[%c0_7, %c0_8] : memref<1x128xf32, #tpu.memory_space<vmem>>, vector<1x128xf32>
      %13 = vector.shape_cast %12 : vector<1x128xf32> to vector<1x128xf32>
      %14 = vector.broadcast %13 : vector<1x128xf32> to vector<16x128xf32>
      %c0_9 = arith.constant 0 : index
      %c0_10 = arith.constant 0 : index
      %15 = vector.load %arg5[%c0_9, %c0_10] : memref<16x128xf32, #tpu.memory_space<vmem>>, vector<16x128xf32>
      tpu.vector_store %arg5[%c0_9, %c0_10], %14 {strides = array<i32>} : memref<16x128xf32, #tpu.memory_space<vmem>>, vector<16x128xf32>,
    } else {
    }
    %c768_i32 = arith.constant 768 : i32
    %3 = arith.muli %arg1, %c768_i32 : i32
    %4 = tpu.assume_multiple %3, 128 : i32
    %5 = arith.index_cast %4 : i32 to index
    %c0 = arith.constant 0 : index
    %6 = vector.load %arg3[%5, %c0] : memref<768x128xbf16, #tpu.memory_space<vmem>>, vector<768x128xbf16>
    %c0_1 = arith.constant 0 : index
    %c0_2 = arith.constant 0 : index
    %7 = vector.load %arg5[%c0_1, %c0_2] : memref<16x128xf32, #tpu.memory_space<vmem>>, vector<16x128xf32>
    %c0_3 = arith.constant 0 : index
    %c0_4 = arith.constant 0 : index
    %8 = vector.load %arg2[%c0_3, %c0_4] : memref<16x768xbf16, #tpu.memory_space<vmem>>, vector<16x768xbf16>
    %cst = arith.constant dense<0.000000e+00> : vector<16x128xf32>
    %9 = tpu.matmul %8, %6, %cst {dimension_numbers = #tpu.dot_dimension_numbers<[1], [0], [0], [1], [0, 0, 1, 1], [], []>} : vector<16x768xbf16>, vector<768x128xbf16>, vector<16x128xf32> -> vector<16x128xf32>
    %10 = arith.addf %7, %9 : vector<16x128xf32>
    %c0_5 = arith.constant 0 : index
    %c0_6 = arith.constant 0 : index
    %11 = vector.load %arg5[%c0_5, %c0_6] : memref<16x128xf32, #tpu.memory_space<vmem>>, vector<16x128xf32>
    tpu.vector_store %arg5[%c0_5, %c0_6], %10 {strides = array<i32>} : memref<16x128xf32, #tpu.memory_space<vmem>>, vector<16x128xf32>,
    return
  }
  func.func @transform_0(%arg0: i32, %arg1: i32) -> (i32, i32) {
    %c0_i32 = arith.constant 0 : i32
    return %arg0, %arg1 : i32, i32
  }
  func.func @transform_1(%arg0: i32, %arg1: i32) -> (i32, i32) {
    %c0_i32 = arith.constant 0 : i32
    %c0_i32_0 = arith.constant 0 : i32
    %c0_i32_1 = arith.constant 0 : i32
    return %c0_i32, %c0_i32_0 : i32, i32
  }
  func.func @transform_2(%arg0: i32, %arg1: i32) -> (i32, i32) {
    %c0_i32 = arith.constant 0 : i32
    %c0_i32_0 = arith.constant 0 : i32
    %c0_i32_1 = arith.constant 0 : i32
    return %c0_i32, %c0_i32_0 : i32, i32
  }
  func.func @transform_3(%arg0: i32, %arg1: i32) -> (i32, i32) {
    %c0_i32 = arith.constant 0 : i32
    %c0_i32_0 = arith.constant 0 : i32
    return %arg0, %c0_i32 : i32, i32
  }
}

</mosaic_0001>

<llo_original>
// kernel: tpu_custom_call.1
$region0: #{tpu_custom_call.1}
  #allocation0 [shape = 'u32[]', space=smem, size = 0x4, offset = 0x4, fixed_abs, tag = 'smem constant byte address 0x4 - core index']
  #allocation1 [shape = 'u32[144,128]{1,0:T(1,128)}', space=vmem, size = 0x12000, scoped, tag = 'internal scratch']
  %s0 = inlined_call_operand.hbm [shape: bf16[16,768], index: 0, kind: input, shape index: {}]
  %s1 = inlined_call_operand.hbm [shape: bf16[768,128], index: 1, kind: input, shape index: {}]
  %s2 = inlined_call_operand.vmem [shape: f32[1,128], index: 2, kind: input, shape index: {}]
  %s3 = inlined_call_operand.hbm [shape: f32[16,128], index: 3, kind: output, shape index: {}]
  %s4 = sld [smem:[#allocation0]]
  $region34: #{tpu_custom_call.1} parent=0
    _
  %s6 = ssub.s32 1, %s4
  %s7 = scalar_select 0, %s6, %s4
  $region1: #{tpu_custom_call.1} parent=0
    #allocation2 [shape = 'u8[24576]{0}', space=vmem, size = 0x6000, scoped, tag = 'input window, operand 0, single buffered']
    #allocation3 [shape = 's32[1]{0}', space=sflag, size = 0x4, scoped, tag = 'scoped memory for tpu_custom_call.1']
    #allocation4 [shape = 's32[1]{0}', space=sflag, size = 0x4, scoped, tag = 'scoped memory for tpu_custom_call.1']
    #allocation5 [shape = 'u8[196608]{0}', space=vmem, size = 0x30000, scoped, tag = 'input window, operand 1, single buffered']
    #allocation6 [shape = 's32[1]{0}', space=sflag, size = 0x4, scoped, tag = 'scoped memory for tpu_custom_call.1']
    #allocation7 [shape = 'u8[8192]{0}', space=vmem, size = 0x2000, scoped, tag = 'output window, operand 0, single buffered']
    %8 = vsyncpa [#allocation3], 0
    %9 = vsyncpa [#allocation6], 0
    %10 = vsyncpa [#allocation4], 0
    // Predicated region
    $region2: #{tpu_custom_call.1} parent=1 // pred_check
      _
    $region3: #{tpu_custom_call.1} parent=1 // pred_check_branch
      %12 = sbr.rel (0) target = $region5
    $region4: #{tpu_custom_call.1} parent=1 // pred_region
      %s14 = ssub.s32 768, 768
      %15 = vsyncadd [#allocation3], %s14
      %s16 = sshll.u32 [#allocation2], 4
      %s17 = int_to_ptr.vmem [resolvable:$true] %s16
      %22 = dma.hbm_to_vmem [thread:$0]  %s0, 768, %s17, [#allocation3], 384, 384, 24
    $region5: #{tpu_custom_call.1} parent=1 // pred_fallthru
      _
    // Predicated region
    $region6: #{tpu_custom_call.1} parent=1 // pred_check
      _
    $region7: #{tpu_custom_call.1} parent=1 // pred_check_branch
      %24 = sbr.rel (0) target = $region9
    $region8: #{tpu_custom_call.1} parent=1 // pred_region
      %s26 = ssub.s32 6144, 6144
      %27 = vsyncadd [#allocation6], %s26
      %s28 = sshll.u32 [#allocation5], 4
      %s29 = int_to_ptr.vmem [resolvable:$true] %s28
      %34 = dma.hbm_to_vmem [thread:$0]  %s1, 6144, %s29, [#allocation6], 64, 64, 4
    $region9: #{tpu_custom_call.1} parent=1 // pred_fallthru
      _
    // Predicated region
    $region10: #{tpu_custom_call.1} parent=1 // pred_check
      _
    $region11: #{tpu_custom_call.1} parent=1 // pred_check_branch
      %36 = sbr.rel (0) target = $region13
    $region12: #{tpu_custom_call.1} parent=1 // pred_region
      _
    $region13: #{tpu_custom_call.1} parent=1 // pred_fallthru
      _
    // Predicated region
    $region14: #{tpu_custom_call.1} parent=1 // pred_check
      _
    $region15: #{tpu_custom_call.1} parent=1 // pred_check_branch
      %38 = sbr.rel (0) target = $region17
    $region16: #{tpu_custom_call.1} parent=1 // pred_region
      %39 = dma.done [#allocation3], 768
    $region17: #{tpu_custom_call.1} parent=1 // pred_fallthru
      _
    // Predicated region
    $region18: #{tpu_custom_call.1} parent=1 // pred_check
      _
    $region19: #{tpu_custom_call.1} parent=1 // pred_check_branch
      %41 = sbr.rel (0) target = $region21
    $region20: #{tpu_custom_call.1} parent=1 // pred_region
      %42 = dma.done [#allocation6], 6144
    $region21: #{tpu_custom_call.1} parent=1 // pred_fallthru
      _
    %p44 = scmp.eq.s32.totalorder 0, 0
    // Predicated region
    $region22: #{tpu_custom_call.1} parent=1 // pred_check
      %p45 = pneg %p44
    $region23: #{tpu_custom_call.1} parent=1 // pred_check_branch
      %47 = sbr.rel (%p45) target = $region25
    $region24: #{tpu_custom_call.1} parent=1 // pred_region
      %v48 = vld [vmem:[%s2] sm:$0x1]
      %v50 = vlaneseq
      %v51 = vshrl.u32 %v50, 7
      %v52 = vsub.s32 0, %v51
      %v53 = vrot.slane %v48, %v52
      %55 = vst [vmem:[#allocation7] sm:$0xff] %v53
      %56 = vst [vmem:[#allocation7 + $0x8] sm:$0xff] %v53
    $region25: #{tpu_custom_call.1} parent=1 // pred_fallthru
      _
    %s57 = smul.u32 0, 768
    %s58 = sshra.s32 %s57, 3
    %s59 = sand.u32 %s57, 7
    %s60 = smul.addr %s58, 4
    %s61 = scalar_lea.vmem [#allocation5], %s60
    %v62 = vld [vmem:[%s61] sm:$0xf]
    %v63 = vld [vmem:[%s61 + $0x4] sm:$0xf]
    %v64 = vld [vmem:[%s61 + $0x8] sm:$0xf]
    %v65 = vld [vmem:[%s61 + $0xc] sm:$0xf]
    %v66 = vld [vmem:[%s61 + $0x10] sm:$0xf]
    %v67 = vld [vmem:[%s61 + $0x14] sm:$0xf]
    %v68 = vld [vmem:[%s61 + $0x18] sm:$0xf]
    %v69 = vld [vmem:[%s61 + $0x1c] sm:$0xf]
    %v70 = vld [vmem:[%s61 + $0x20] sm:$0xf]
    %v71 = vld [vmem:[%s61 + $0x24] sm:$0xf]
    %v72 = vld [vmem:[%s61 + $0x28] sm:$0xf]
    %v73 = vld [vmem:[%s61 + $0x2c] sm:$0xf]
    %v74 = vld [vmem:[%s61 + $0x30] sm:$0xf]
    %v75 = vld [vmem:[%s61 + $0x34] sm:$0xf]
    %v76 = vld [vmem:[%s61 + $0x38] sm:$0xf]
    %v77 = vld [vmem:[%s61 + $0x3c] sm:$0xf]
    %v78 = vld [vmem:[%s61 + $0x40] sm:$0xf]
    %v79 = vld [vmem:[%s61 + $0x44] sm:$0xf]
    %v80 = vld [vmem:[%s61 + $0x48] sm:$0xf]
    %v81 = vld [vmem:[%s61 + $0x4c] sm:$0xf]
    %v82 = vld [vmem:[%s61 + $0x50] sm:$0xf]
    %v83 = vld [vmem:[%s61 + $0x54] sm:$0xf]
    %v84 = vld [vmem:[%s61 + $0x58] sm:$0xf]
    %v85 = vld [vmem:[%s61 + $0x5c] sm:$0xf]
    %v86 = vld [vmem:[%s61 + $0x60] sm:$0xf]
    %v87 = vld [vmem:[%s61 + $0x64] sm:$0xf]
    %v88 = vld [vmem:[%s61 + $0x68] sm:$0xf]
    %v89 = vld [vmem:[%s61 + $0x6c] sm:$0xf]
    %v90 = vld [vmem:[%s61 + $0x70] sm:$0xf]
    %v91 = vld [vmem:[%s61 + $0x74] sm:$0xf]
    %v92 = vld [vmem:[%s61 + $0x78] sm:$0xf]
    %v93 = vld [vmem:[%s61 + $0x7c] sm:$0xf]
    %v94 = vld [vmem:[%s61 + $0x80] sm:$0xf]
    %v95 = vld [vmem:[%s61 + $0x84] sm:$0xf]
    %v96 = vld [vmem:[%s61 + $0x88] sm:$0xf]
    %v97 = vld [vmem:[%s61 + $0x8c] sm:$0xf]
    %v98 = vld [vmem:[%s61 + $0x90] sm:$0xf]
    %v99 = vld [vmem:[%s61 + $0x94] sm:$0xf]
    %v100 = vld [vmem:[%s61 + $0x98] sm:$0xf]
    %v101 = vld [vmem:[%s61 + $0x9c] sm:$0xf]
    %v102 = vld [vmem:[%s61 + $0xa0] sm:$0xf]
    %v103 = vld [vmem:[%s61 + $0xa4] sm:$0xf]
    %v104 = vld [vmem:[%s61 + $0xa8] sm:$0xf]
    %v105 = vld [vmem:[%s61 + $0xac] sm:$0xf]
    %v106 = vld [vmem:[%s61 + $0xb0] sm:$0xf]
    %v107 = vld [vmem:[%s61 + $0xb4] sm:$0xf]
    %v108 = vld [vmem:[%s61 + $0xb8] sm:$0xf]
    %v109 = vld [vmem:[%s61 + $0xbc] sm:$0xf]
    %v110 = vld [vmem:[%s61 + $0xc0] sm:$0xf]
    %v111 = vld [vmem:[%s61 + $0xc4] sm:$0xf]
    %v112 = vld [vmem:[%s61 + $0xc8] sm:$0xf]
    %v113 = vld [vmem:[%s61 + $0xcc] sm:$0xf]
    %v114 = vld [vmem:[%s61 + $0xd0] sm:$0xf]
    %v115 = vld [vmem:[%s61 + $0xd4] sm:$0xf]
    %v116 = vld [vmem:[%s61 + $0xd8] sm:$0xf]
    %v117 = vld [vmem:[%s61 + $0xdc] sm:$0xf]
    %v118 = vld [vmem:[%s61 + $0xe0] sm:$0xf]
    %v119 = vld [vmem:[%s61 + $0xe4] sm:$0xf]
    %v120 = vld [vmem:[%s61 + $0xe8] sm:$0xf]
    %v121 = vld [vmem:[%s61 + $0xec] sm:$0xf]
    %v122 = vld [vmem:[%s61 + $0xf0] sm:$0xf]
    %v123 = vld [vmem:[%s61 + $0xf4] sm:$0xf]
    %v124 = vld [vmem:[%s61 + $0xf8] sm:$0xf]
    %v125 = vld [vmem:[%s61 + $0xfc] sm:$0xf]
    %v126 = vld [vmem:[%s61 + $0x100] sm:$0xf]
    %v127 = vld [vmem:[%s61 + $0x104] sm:$0xf]
    %v128 = vld [vmem:[%s61 + $0x108] sm:$0xf]
    %v129 = vld [vmem:[%s61 + $0x10c] sm:$0xf]
    %v130 = vld [vmem:[%s61 + $0x110] sm:$0xf]
    %v131 = vld [vmem:[%s61 + $0x114] sm:$0xf]
    %v132 = vld [vmem:[%s61 + $0x118] sm:$0xf]
    %v133 = vld [vmem:[%s61 + $0x11c] sm:$0xf]
    %v134 = vld [vmem:[%s61 + $0x120] sm:$0xf]
    %v135 = vld [vmem:[%s61 + $0x124] sm:$0xf]
    %v136 = vld [vmem:[%s61 + $0x128] sm:$0xf]
    %v137 = vld [vmem:[%s61 + $0x12c] sm:$0xf]
    %v138 = vld [vmem:[%s61 + $0x130] sm:$0xf]
    %v139 = vld [vmem:[%s61 + $0x134] sm:$0xf]
    %v140 = vld [vmem:[%s61 + $0x138] sm:$0xf]
    %v141 = vld [vmem:[%s61 + $0x13c] sm:$0xf]
    %v142 = vld [vmem:[%s61 + $0x140] sm:$0xf]
    %v143 = vld [vmem:[%s61 + $0x144] sm:$0xf]
    %v144 = vld [vmem:[%s61 + $0x148] sm:$0xf]
    %v145 = vld [vmem:[%s61 + $0x14c] sm:$0xf]
    %v146 = vld [vmem:[%s61 + $0x150] sm:$0xf]
    %v147 = vld [vmem:[%s61 + $0x154] sm:$0xf]
    %v148 = vld [vmem:[%s61 + $0x158] sm:$0xf]
    %v149 = vld [vmem:[%s61 + $0x15c] sm:$0xf]
    %v150 = vld [vmem:[%s61 + $0x160] sm:$0xf]
    %v151 = vld [vmem:[%s61 + $0x164] sm:$0xf]
    %v152 = vld [vmem:[%s61 + $0x168] sm:$0xf]
    %v153 = vld [vmem:[%s61 + $0x16c] sm:$0xf]
    %v154 = vld [vmem:[%s61 + $0x170] sm:$0xf]
    %v155 = vld [vmem:[%s61 + $0x174] sm:$0xf]
    %v156 = vld [vmem:[%s61 + $0x178] sm:$0xf]
    %v157 = vld [vmem:[%s61 + $0x17c] sm:$0xf]
    %v158 = vld [vmem:[#allocation7] sm:$0xff]
    %v159 = vld [vmem:[#allocation7 + $0x8] sm:$0xff]
    %v160 = vld [vmem:[#allocation2] sm:$0xff]
    %v161 = vld [vmem:[#allocation2 + $0x8] sm:$0xff]
    %v162 = vld [vmem:[#allocation2 + $0x10] sm:$0xff]
    %v163 = vld [vmem:[#allocation2 + $0x18] sm:$0xff]
    %v164 = vld [vmem:[#allocation2 + $0x20] sm:$0xff]
    %v165 = vld [vmem:[#allocation2 + $0x28] sm:$0xff]
    %v172 = vunpack.c.l.b16 %v160
    %v173 = vunpack.c.h.b16 %v160
    %v174 = vunpack.c.l.b16 %v161
    %v175 = vunpack.c.h.b16 %v161
    %v176 = vunpack.c.l.b16 %v162
    %v177 = vunpack.c.h.b16 %v162
    %v178 = vunpack.c.l.b16 %v163
    %v179 = vunpack.c.h.b16 %v163
    %v180 = vunpack.c.l.b16 %v164
    %v181 = vunpack.c.h.b16 %v164
    %v182 = vunpack.c.l.b16 %v165
    %v183 = vunpack.c.h.b16 %v165
    %v184 = vpack.c.b16 %v178, %v172
    %v185 = vpack.c.b16 %v179, %v173
    %v186 = vpack.c.b16 %v180, %v174
    %v187 = vpack.c.b16 %v181, %v175
    %v188 = vpack.c.b16 %v182, %v176
    %v189 = vpack.c.b16 %v183, %v177
    %v292 = vunpack.c.l.b16 %v62
    %v293 = vunpack.c.l.b16 %v63
    %v294 = vunpack.c.l.b16 %v64
    %v295 = vunpack.c.l.b16 %v65
    %v296 = vunpack.c.l.b16 %v66
    %v297 = vunpack.c.l.b16 %v67
    %v298 = vunpack.c.l.b16 %v68
    %v299 = vunpack.c.l.b16 %v69
    %v300 = vunpack.c.l.b16 %v70
    %v301 = vunpack.c.l.b16 %v71
    %v302 = vunpack.c.l.b16 %v72
    %v303 = vunpack.c.l.b16 %v73
    %v304 = vunpack.c.l.b16 %v74
    %v305 = vunpack.c.l.b16 %v75
    %v306 = vunpack.c.l.b16 %v76
    %v307 = vunpack.c.l.b16 %v77
    %v308 = vunpack.c.l.b16 %v78
    %v309 = vunpack.c.l.b16 %v79
    %v310 = vunpack.c.l.b16 %v80
    %v311 = vunpack.c.l.b16 %v81
    %v312 = vunpack.c.l.b16 %v82
    %v313 = vunpack.c.l.b16 %v83
    %v314 = vunpack.c.l.b16 %v84
    %v315 = vunpack.c.l.b16 %v85
    %v316 = vunpack.c.l.b16 %v86
    %v317 = vunpack.c.l.b16 %v87
    %v318 = vunpack.c.l.b16 %v88
    %v319 = vunpack.c.l.b16 %v89
    %v320 = vunpack.c.l.b16 %v90
    %v321 = vunpack.c.l.b16 %v91
    %v322 = vunpack.c.l.b16 %v92
    %v323 = vunpack.c.l.b16 %v93
    %v324 = vunpack.c.l.b16 %v94
    %v325 = vunpack.c.l.b16 %v95
    %v326 = vunpack.c.l.b16 %v96
    %v327 = vunpack.c.l.b16 %v97
    %v328 = vunpack.c.l.b16 %v98
    %v329 = vunpack.c.l.b16 %v99
    %v330 = vunpack.c.l.b16 %v100
    %v331 = vunpack.c.l.b16 %v101
    %v332 = vunpack.c.l.b16 %v102
    %v333 = vunpack.c.l.b16 %v103
    %v334 = vunpack.c.l.b16 %v104
    %v335 = vunpack.c.l.b16 %v105
    %v336 = vunpack.c.l.b16 %v106
    %v337 = vunpack.c.l.b16 %v107
    %v338 = vunpack.c.l.b16 %v108
    %v339 = vunpack.c.l.b16 %v109
    %v340 = vunpack.c.l.b16 %v110
    %v341 = vunpack.c.l.b16 %v111
    %v342 = vunpack.c.l.b16 %v112
    %v343 = vunpack.c.l.b16 %v113
    %v344 = vunpack.c.l.b16 %v114
    %v345 = vunpack.c.l.b16 %v115
    %v346 = vunpack.c.l.b16 %v116
    %v347 = vunpack.c.l.b16 %v117
    %v348 = vunpack.c.l.b16 %v118
    %v349 = vunpack.c.l.b16 %v119
    %v350 = vunpack.c.l.b16 %v120
    %v351 = vunpack.c.l.b16 %v121
    %v352 = vunpack.c.l.b16 %v122
    %v353 = vunpack.c.l.b16 %v123
    %v354 = vunpack.c.l.b16 %v124
    %v355 = vunpack.c.l.b16 %v125
    %v356 = vunpack.c.l.b16 %v126
    %v357 = vunpack.c.l.b16 %v127
    %v358 = vunpack.c.l.b16 %v128
    %v359 = vunpack.c.l.b16 %v129
    %v360 = vunpack.c.l.b16 %v130
    %v361 = vunpack.c.l.b16 %v131
    %v362 = vunpack.c.l.b16 %v132
    %v363 = vunpack.c.l.b16 %v133
    %v364 = vunpack.c.l.b16 %v134
    %v365 = vunpack.c.l.b16 %v135
    %v366 = vunpack.c.l.b16 %v136
    %v367 = vunpack.c.l.b16 %v137
    %v368 = vunpack.c.l.b16 %v138
    %v369 = vunpack.c.l.b16 %v139
    %v370 = vunpack.c.l.b16 %v140
    %v371 = vunpack.c.l.b16 %v141
    %v372 = vunpack.c.l.b16 %v142
    %v373 = vunpack.c.l.b16 %v143
    %v374 = vunpack.c.l.b16 %v144
    %v375 = vunpack.c.l.b16 %v145
    %v376 = vunpack.c.l.b16 %v146
    %v377 = vunpack.c.l.b16 %v147
    %v378 = vunpack.c.l.b16 %v148
    %v379 = vunpack.c.l.b16 %v149
    %v380 = vunpack.c.l.b16 %v150
    %v381 = vunpack.c.l.b16 %v151
    %v382 = vunpack.c.l.b16 %v152
    %v383 = vunpack.c.l.b16 %v153
    %v384 = vunpack.c.l.b16 %v154
    %v385 = vunpack.c.l.b16 %v155
    %v386 = vunpack.c.l.b16 %v156
    %v387 = vunpack.c.l.b16 %v157
    %v388 = vpack.c.b16 %v293, %v292
    %v389 = vpack.c.b16 %v295, %v294
    %v390 = vpack.c.b16 %v297, %v296
    %v391 = vpack.c.b16 %v299, %v298
    %v392 = vpack.c.b16 %v301, %v300
    %v393 = vpack.c.b16 %v303, %v302
    %v394 = vpack.c.b16 %v305, %v304
    %v395 = vpack.c.b16 %v307, %v306
    %v396 = vpack.c.b16 %v309, %v308
    %v397 = vpack.c.b16 %v311, %v310
    %v398 = vpack.c.b16 %v313, %v312
    %v399 = vpack.c.b16 %v315, %v314
    %v400 = vpack.c.b16 %v317, %v316
    %v401 = vpack.c.b16 %v319, %v318
    %v402 = vpack.c.b16 %v321, %v320
    %v403 = vpack.c.b16 %v323, %v322
    %v404 = vpack.c.b16 %v325, %v324
    %v405 = vpack.c.b16 %v327, %v326
    %v406 = vpack.c.b16 %v329, %v328
    %v407 = vpack.c.b16 %v331, %v330
    %v408 = vpack.c.b16 %v333, %v332
    %v409 = vpack.c.b16 %v335, %v334
    %v410 = vpack.c.b16 %v337, %v336
    %v411 = vpack.c.b16 %v339, %v338
    %v412 = vpack.c.b16 %v341, %v340
    %v413 = vpack.c.b16 %v343, %v342
    %v414 = vpack.c.b16 %v345, %v344
    %v415 = vpack.c.b16 %v347, %v346
    %v416 = vpack.c.b16 %v349, %v348
    %v417 = vpack.c.b16 %v351, %v350
    %v418 = vpack.c.b16 %v353, %v352
    %v419 = vpack.c.b16 %v355, %v354
    %v420 = vpack.c.b16 %v357, %v356
    %v421 = vpack.c.b16 %v359, %v358
    %v422 = vpack.c.b16 %v361, %v360
    %v423 = vpack.c.b16 %v363, %v362
    %v424 = vpack.c.b16 %v365, %v364
    %v425 = vpack.c.b16 %v367, %v366
    %v426 = vpack.c.b16 %v369, %v368
    %v427 = vpack.c.b16 %v371, %v370
    %v428 = vpack.c.b16 %v373, %v372
    %v429 = vpack.c.b16 %v375, %v374
    %v430 = vpack.c.b16 %v377, %v376
    %v431 = vpack.c.b16 %v379, %v378
    %v432 = vpack.c.b16 %v381, %v380
    %v433 = vpack.c.b16 %v383, %v382
    %v434 = vpack.c.b16 %v385, %v384
    %v435 = vpack.c.b16 %v387, %v386
    %484 = vmatprep.subr.bf16.mxu0 0
    %485 = vmatpush1.bf16.msra.mxu0 %v388
    %486 = vmatprep.subr.bf16.mxu0 0
    %487 = vmatpush1.bf16.msra.mxu0 %v389
    %488 = vmatprep.subr.bf16.mxu0 0
    %489 = vmatpush1.bf16.msra.mxu0 %v390
    %490 = vmatprep.subr.bf16.mxu0 0
    %491 = vmatpush1.bf16.msra.mxu0 %v391
    %492 = vmatprep.subr.bf16.mxu0 0
    %493 = vmatpush1.bf16.msra.mxu0 %v392
    %494 = vmatprep.subr.bf16.mxu0 0
    %495 = vmatpush1.bf16.msra.mxu0 %v393
    %496 = vmatprep.subr.bf16.mxu0 0
    %497 = vmatpush1.bf16.msra.mxu0 %v394
    %498 = vmatprep.subr.bf16.mxu0 0
    %499 = vmatpush1.bf16.msra.mxu0 %v395
    %500 = vmatprep.subr.bf16.mxu0 0
    %501 = vmatpush1.bf16.msra.mxu0 %v396
    %502 = vmatprep.subr.bf16.mxu0 0
    %503 = vmatpush1.bf16.msra.mxu0 %v397
    %504 = vmatprep.subr.bf16.mxu0 0
    %505 = vmatpush1.bf16.msra.mxu0 %v398
    %506 = vmatprep.subr.bf16.mxu0 0
    %507 = vmatpush1.bf16.msra.mxu0 %v399
    %508 = vmatprep.subr.bf16.mxu0 0
    %509 = vmatpush1.bf16.msra.mxu0 %v400
    %510 = vmatprep.subr.bf16.mxu0 0
    %511 = vmatpush1.bf16.msra.mxu0 %v401
    %512 = vmatprep.subr.bf16.mxu0 0
    %513 = vmatpush1.bf16.msra.mxu0 %v402
    %514 = vmatprep.subr.bf16.mxu0 0
    %515 = vmatpush1.bf16.msra.mxu0 %v403
    %516 = vmatprep.mubr.bf16.mxu0 %v185
    %517 = vmatmul.mubr.bf16.gmra.mrb[0].mxu0 %v184
    %v518 = vpop.f32.mrb[0].mxu0
    %v519 = vadd.f32 0.0, %v518
    %v520 = vpop.f32.mrb[0].mxu0
    %v521 = vpop.f32.mrb[0].mxu0
    %v522 = vadd.f32 0.0, %v521
    %v523 = vpop.f32.mrb[0].mxu0
    %524 = vdwg.mxu0
    %525 = vmatprep.subr.bf16.mxu0 0
    %526 = vmatpush1.bf16.msra.mxu0 %v404
    %527 = vmatprep.subr.bf16.mxu0 0
    %528 = vmatpush1.bf16.msra.mxu0 %v405
    %529 = vmatprep.subr.bf16.mxu0 0
    %530 = vmatpush1.bf16.msra.mxu0 %v406
    %531 = vmatprep.subr.bf16.mxu0 0
    %532 = vmatpush1.bf16.msra.mxu0 %v407
    %533 = vmatprep.subr.bf16.mxu0 0
    %534 = vmatpush1.bf16.msra.mxu0 %v408
    %535 = vmatprep.subr.bf16.mxu0 0
    %536 = vmatpush1.bf16.msra.mxu0 %v409
    %537 = vmatprep.subr.bf16.mxu0 0
    %538 = vmatpush1.bf16.msra.mxu0 %v410
    %539 = vmatprep.subr.bf16.mxu0 0
    %540 = vmatpush1.bf16.msra.mxu0 %v411
    %541 = vmatprep.subr.bf16.mxu0 0
    %542 = vmatpush1.bf16.msra.mxu0 %v412
    %543 = vmatprep.subr.bf16.mxu0 0
    %544 = vmatpush1.bf16.msra.mxu0 %v413
    %545 = vmatprep.subr.bf16.mxu0 0
    %546 = vmatpush1.bf16.msra.mxu0 %v414
    %547 = vmatprep.subr.bf16.mxu0 0
    %548 = vmatpush1.bf16.msra.mxu0 %v415
    %549 = vmatprep.subr.bf16.mxu0 0
    %550 = vmatpush1.bf16.msra.mxu0 %v416
    %551 = vmatprep.subr.bf16.mxu0 0
    %552 = vmatpush1.bf16.msra.mxu0 %v417
    %553 = vmatprep.subr.bf16.mxu0 0
    %554 = vmatpush1.bf16.msra.mxu0 %v418
    %555 = vmatprep.subr.bf16.mxu0 0
    %556 = vmatpush1.bf16.msra.mxu0 %v419
    %557 = vmatprep.mubr.bf16.mxu0 %v187
    %558 = vmatmul.mubr.bf16.gmra.mrb[0].mxu0 %v186
    %v559 = vpop.f32.mrb[0].mxu0
    %v560 = vadd.f32 %v519, %v559
    %v561 = vpop.f32.mrb[0].mxu0
    %v562 = vpop.f32.mrb[0].mxu0
    %v563 = vadd.f32 %v522, %v562
    %v564 = vpop.f32.mrb[0].mxu0
    %565 = vdwg.mxu0
    %566 = vmatprep.subr.bf16.mxu0 0
    %567 = vmatpush1.bf16.msra.mxu0 %v420
    %568 = vmatprep.subr.bf16.mxu0 0
    %569 = vmatpush1.bf16.msra.mxu0 %v421
    %570 = vmatprep.subr.bf16.mxu0 0
    %571 = vmatpush1.bf16.msra.mxu0 %v422
    %572 = vmatprep.subr.bf16.mxu0 0
    %573 = vmatpush1.bf16.msra.mxu0 %v423
    %574 = vmatprep.subr.bf16.mxu0 0
    %575 = vmatpush1.bf16.msra.mxu0 %v424
    %576 = vmatprep.subr.bf16.mxu0 0
    %577 = vmatpush1.bf16.msra.mxu0 %v425
    %578 = vmatprep.subr.bf16.mxu0 0
    %579 = vmatpush1.bf16.msra.mxu0 %v426
    %580 = vmatprep.subr.bf16.mxu0 0
    %581 = vmatpush1.bf16.msra.mxu0 %v427
    %582 = vmatprep.subr.bf16.mxu0 0
    %583 = vmatpush1.bf16.msra.mxu0 %v428
    %584 = vmatprep.subr.bf16.mxu0 0
    %585 = vmatpush1.bf16.msra.mxu0 %v429
    %586 = vmatprep.subr.bf16.mxu0 0
    %587 = vmatpush1.bf16.msra.mxu0 %v430
    %588 = vmatprep.subr.bf16.mxu0 0
    %589 = vmatpush1.bf16.msra.mxu0 %v431
    %590 = vmatprep.subr.bf16.mxu0 0
    %591 = vmatpush1.bf16.msra.mxu0 %v432
    %592 = vmatprep.subr.bf16.mxu0 0
    %593 = vmatpush1.bf16.msra.mxu0 %v433
    %594 = vmatprep.subr.bf16.mxu0 0
    %595 = vmatpush1.bf16.msra.mxu0 %v434
    %596 = vmatprep.subr.bf16.mxu0 0
    %597 = vmatpush1.bf16.msra.mxu0 %v435
    %598 = vmatprep.mubr.bf16.mxu0 %v189
    %599 = vmatmul.mubr.bf16.gmra.mrb[0].mxu0 %v188
    %v600 = vpop.f32.mrb[0].mxu0
    %v601 = vadd.f32 %v560, %v600
    %v602 = vpop.f32.mrb[0].mxu0
    %v603 = vpop.f32.mrb[0].mxu0
    %v604 = vadd.f32 %v563, %v603
    %v605 = vpop.f32.mrb[0].mxu0
    %606 = vdwg.mxu0
    %v607 = vadd.f32 %v158, %v601
    %v608 = vadd.f32 %v159, %v604
    %609 = vst [vmem:[#allocation7] sm:$0xff] %v607
    %610 = vst [vmem:[#allocation7 + $0x8] sm:$0xff] %v608
    // Predicated region
    $region26: #{tpu_custom_call.1} parent=1 // pred_check
      _
    $region27: #{tpu_custom_call.1} parent=1 // pred_check_branch
      %612 = sbr.rel (0) target = $region29
    $region28: #{tpu_custom_call.1} parent=1 // pred_region
      %s614 = ssub.s32 256, 256
      %615 = vsyncadd [#allocation4], %s614
      %s616 = sshll.u32 [#allocation7], 4
      %s617 = int_to_ptr.vmem [resolvable:$true] %s616
      %622 = dma.vmem_to_hbm [thread:$0]  %s617, 256, %s3, [#allocation4], 128, 128, 8
    $region29: #{tpu_custom_call.1} parent=1 // pred_fallthru
      _
    // Predicated region
    $region30: #{tpu_custom_call.1} parent=1 // pred_check
      _
    $region31: #{tpu_custom_call.1} parent=1 // pred_check_branch
      %624 = sbr.rel (0) target = $region33
    $region32: #{tpu_custom_call.1} parent=1 // pred_region
      %625 = dma.done [#allocation4], 256
    $region33: #{tpu_custom_call.1} parent=1 // pred_fallthru
      _
    %626 = vsyncpa [#allocation3], 1
    %627 = vsyncpa [#allocation6], 1
    %628 = vsyncpa [#allocation4], 1

</llo_original>
